<compile_context>
chip_gen: v5e
topology: v5e:2x2
jax: 0.10.0
libtpu: 0.0.40
codegen_flags: <defaults>
</compile_context>

<pallas_src>
import functools

import jax
import jax.numpy as jnp
from jax.experimental import pallas as pl
from jax.experimental.pallas import tpu as pltpu


def _round_up(x, m):
    return ((x + m - 1) // m) * m


def _hier_kernel(*refs, sample, eps_in_kernel, Y, Z):
    if sample and eps_in_kernel:
        (seed_ref, x_ref, mask_ref, w_x_ref, b_ref, w_y_ref, out_ref) = refs
    elif sample:
        (x_ref, mask_ref, eps_y_ref, eps_z_ref,
         w_x_ref, b_ref, w_y_ref, out_ref) = refs
    else:
        (x_ref, mask_ref, w_x_ref, b_ref, w_y_ref, out_ref) = refs

    x = x_ref[...]                                  # (tm, D)
    m = mask_ref[...].astype(jnp.float32)           # (tm, 1), broadcasts

    # One fused MXU pass for all four x-side heads:
    #   columns = [mean2 (Y) | logvar2 (Y) | mean_x_part (Z) | logvar_x_part (Z)]
    h = jnp.dot(x, w_x_ref[...], preferred_element_type=jnp.float32)
    h = h + b_ref[...].astype(jnp.float32)
    mean2 = h[:, :Y]
    logvar2 = h[:, Y:2 * Y]

    if sample:
        if eps_in_kernel:
            # One seed per grid step -> independent hardware PRNG stream.
            pltpu.prng_seed(seed_ref[0] + pl.program_id(0))
            eps_y = pltpu.stateful_normal(mean2.shape, jnp.float32)
        else:
            eps_y = eps_y_ref[...].astype(jnp.float32)
        y = (mean2 + jnp.exp(0.5 * logvar2) * eps_y) * m
    else:
        y = mean2 * m

    # One fused MXU pass for the y-side block of the concat-Linear:
    #   columns = [mean_y_part (Z) | logvar_y_part (Z)]
    yz = jnp.dot(y, w_y_ref[...], preferred_element_type=jnp.float32)
    q = h[:, 2 * Y:] + yz                            # [mean_q | logvar_q]
    mean_q = q[:, :Z]
    logvar_q = q[:, Z:]

    if sample:
        if eps_in_kernel:
            eps_z = pltpu.stateful_normal(mean_q.shape, jnp.float32)
        else:
            eps_z = eps_z_ref[...].astype(jnp.float32)
        z = (mean_q + jnp.exp(0.5 * logvar_q) * eps_z) * m
    else:
        z = mean_q * m

    # Single lane-dense store: [mean2 | logvar2 | mean_q | logvar_q | y | z].
    # The first 2Y+2Z columns keep their h-derived lane offsets.
    out_ref[...] = jnp.concatenate([h[:, :2 * Y], q, y, z],
                                   axis=-1).astype(out_ref.dtype)


def _choose_tm(M, tm_target, min_steps=4):
    """Large tile for BW, but keep >= ~min_steps grid steps (v7x megacore)."""
    tm = min(int(tm_target), _round_up(pl.cdiv(M, min_steps), 8))
    return max(8, _round_up(tm, 8))


def gaussian_hier_forward(inputs, mask, params, *, sample,
                          eps_y=None, eps_z=None,
                          eps_in_kernel=False, seed=0,
                          tm=4096, out_dtype=None):
    """
    inputs: (B, T, D)
    mask:   (B, T)
    params: dict of weights (PyTorch Linear convention: W is (out, in))
    sample: python bool (compile-time)
    eps_y / eps_z: standard-normal noise, required iff sample=True and
                   eps_in_kernel=False.
    eps_in_kernel: draw eps on-chip with the TPU PRNG (no eps HBM streams).
    Returns (z, y, mean_qs, logvar_qs, mean2_qs, logvar2_qs), each (B, T, .).
    """
    B, T, D = inputs.shape
    Y = params["w_m2"].shape[0]
    Z = params["w_m"].shape[0]
    M = B * T
    W_OUT = 3 * Y + 3 * Z
    if out_dtype is None:
        out_dtype = inputs.dtype

    tm_eff = _choose_tm(M, tm)
    grid = (pl.cdiv(M, tm_eff),)          # ragged last block handled by Pallas

    x2d = inputs.reshape(M, D)
    mask2d = mask.reshape(M, 1)

    # Fused weights (PyTorch (out,in) -> (in,out)):
    #   W_x : (D, 2Y+2Z) = [w_m2^T | w_lv2^T | w_m[:, :D]^T | w_lv[:, :D]^T]
    #   W_y : (Y, 2Z)    = [w_m[:, D:]^T | w_lv[:, D:]^T]
    #   b   : (1, 2Y+2Z) = [b_m2 | b_lv2 | b_m | b_lv]
    w_x = jnp.concatenate(
        [params["w_m2"].T, params["w_lv2"].T,
         params["w_m"][:, :D].T, params["w_lv"][:, :D].T], axis=1)
    w_y = jnp.concatenate(
        [params["w_m"][:, D:].T, params["w_lv"][:, D:].T], axis=1)
    b_all = jnp.concatenate(
        [params["b_m2"], params["b_lv2"], params["b_m"], params["b_lv"]]
    ).reshape(1, 2 * Y + 2 * Z)

    # index_maps take *_ so they also accept the scalar-prefetch ref (seed).
    def row_spec(cols):
        return pl.BlockSpec((tm_eff, cols), lambda i, *_: (i, 0))

    def full_spec(shape):
        return pl.BlockSpec(shape, lambda i, *_: (0, 0))

    use_kernel_eps = bool(sample and eps_in_kernel)
    use_ext_eps = bool(sample and not eps_in_kernel)

    num_prefetch = 0
    prefetch_args = []
    if use_kernel_eps:
        num_prefetch = 1
        prefetch_args = [jnp.asarray([seed], dtype=jnp.int32)]

    in_specs = [row_spec(D), row_spec(1)]
    args = [x2d, mask2d]
    if use_ext_eps:
        in_specs += [row_spec(Y), row_spec(Z)]
        args += [eps_y.reshape(M, Y), eps_z.reshape(M, Z)]
    in_specs += [full_spec((D, 2 * Y + 2 * Z)),
                 full_spec((1, 2 * Y + 2 * Z)),
                 full_spec((Y, 2 * Z))]
    args += [w_x, b_all, w_y]

    out_specs = row_spec(W_OUT)
    out_shape = jax.ShapeDtypeStruct((M, W_OUT), out_dtype)

    # VMEM budget: 1.5x (double-buffered row streams + weights), 16..48 MiB.
    in_b = jnp.dtype(inputs.dtype).itemsize
    out_b = jnp.dtype(out_dtype).itemsize
    w_b = jnp.dtype(w_x.dtype).itemsize
    row_bytes = D * in_b + jnp.dtype(mask.dtype).itemsize
    if use_ext_eps:
        row_bytes += (Y + Z) * jnp.dtype(eps_y.dtype).itemsize
    est = (2 * tm_eff * (row_bytes + W_OUT * out_b)
           + 2 * ((D + 1) * (2 * Y + 2 * Z) + Y * 2 * Z) * w_b)
    vmem_limit = int(min(max(int(1.5 * est), 16 << 20), 48 << 20))

    kernel = functools.partial(_hier_kernel, sample=sample,
                               eps_in_kernel=use_kernel_eps, Y=Y, Z=Z)

    out = pl.pallas_call(
        kernel,
        out_shape=out_shape,
        grid_spec=pltpu.PrefetchScalarGridSpec(
            num_scalar_prefetch=num_prefetch,
            grid=grid,
            in_specs=in_specs,
            out_specs=out_specs,
        ),
        compiler_params=pltpu.CompilerParams(
            dimension_semantics=("parallel",),
            vmem_limit_bytes=vmem_limit),
    )(*prefetch_args, *args)

    # Slab columns: [mean2 | logvar2 | mean_q | logvar_q | y | z]
    mean2_qs = out[:, :Y]
    logvar2_qs = out[:, Y:2 * Y]
    mean_qs = out[:, 2 * Y:2 * Y + Z]
    logvar_qs = out[:, 2 * Y + Z:2 * Y + 2 * Z]
    y = out[:, 2 * Y + 2 * Z:2 * Y + 2 * Z + Y]
    z = out[:, 2 * Y + 2 * Z + Y:]

    return (z.reshape(B, T, Z), y.reshape(B, T, Y),
            mean_qs.reshape(B, T, Z), logvar_qs.reshape(B, T, Z),
            mean2_qs.reshape(B, T, Y), logvar2_qs.reshape(B, T, Y))


def _reference(inputs, mask, params, sample, eps_y=None, eps_z=None):
    """Plain-JAX reference mirroring the PyTorch forward."""
    mean2 = inputs @ params["w_m2"].T + params["b_m2"]
    logvar2 = inputs @ params["w_lv2"].T + params["b_lv2"]
    m = mask[..., None]
    if sample:
        y = (mean2 + jnp.exp(0.5 * logvar2) * eps_y) * m
    else:
        y = mean2 * m
    gi = jnp.concatenate([inputs, y], axis=-1)
    mean_q = gi @ params["w_m"].T + params["b_m"]
    logvar_q = gi @ params["w_lv"].T + params["b_lv"]
    if sample:
        z = (mean_q + jnp.exp(0.5 * logvar_q) * eps_z) * m
    else:
        z = mean_q * m
    return z, y, mean_q, logvar_q, mean2, logvar2


if __name__ == "__main__":
    # Small shapes: input_size=32, latent_y=16, latent_z=16.
    D, Y, Z = 32, 16, 16

    key = jax.random.PRNGKey(0)
    keys = jax.random.split(key, 12)

    s = 0.05
    params = {
        "w_m2":  s * jax.random.normal(keys[1], (Y, D), jnp.float32),
        "b_m2":  s * jax.random.normal(keys[2], (Y,),   jnp.float32),
        "w_lv2": s * jax.random.normal(keys[3], (Y, D), jnp.float32),
        "b_lv2": s * jax.random.normal(keys[4], (Y,),   jnp.float32),
        "w_m":   s * jax.random.normal(keys[5], (Z, D + Y), jnp.float32),
        "b_m":   s * jax.random.normal(keys[6], (Z,),       jnp.float32),
        "w_lv":  s * jax.random.normal(keys[7], (Z, D + Y), jnp.float32),
        "b_lv":  s * jax.random.normal(keys[8], (Z,),       jnp.float32),
    }

    ok = True
    # (2, 8): M divides the tile evenly.  (2, 11): exercises the ragged
    # last block (no jnp.pad anymore).
    for case, (B, T) in enumerate([(2, 8), (2, 11)]):
        ck = jax.random.split(jax.random.PRNGKey(100 + case), 4)
        inputs = jax.random.normal(ck[0], (B, T, D), jnp.float32)
        valid = jnp.array([[T], [max(T - 3, 1)]])
        mask = jnp.where(jnp.arange(T)[None, :] < valid, 1.0, 0.0
                         ).astype(jnp.float32)
        eps_y = jax.random.normal(ck[1], (B, T, Y), jnp.float32)
        eps_z = jax.random.normal(ck[2], (B, T, Z), jnp.float32)

        # Deterministic + externally supplied noise: exact match to reference.
        for sample in (False, True):
            outs = gaussian_hier_forward(inputs, mask, params, sample=sample,
                                         eps_y=eps_y, eps_z=eps_z)
            outs = jax.block_until_ready(outs)
            refs = _reference(inputs, mask, params, sample, eps_y, eps_z)
            for o, r in zip(outs, refs):
                if o.shape != r.shape or not jnp.allclose(o, r,
                                                          atol=1e-5, rtol=1e-5):
                    ok = False

        # In-kernel hardware-PRNG noise: check the deterministic pieces,
        # finiteness and masking (bitwise noise match is not expected).
        try:
            outs = gaussian_hier_forward(inputs, mask, params, sample=True,
                                         eps_in_kernel=True, seed=42)
            outs = jax.block_until_ready(outs)
        except Exception:
            # Optional fast path; exact module semantics are fully covered by
            # the external-eps path above.
            outs = None
        if outs is not None:
            z_k, y_k, mq_k, lq_k, m2_k, lv2_k = outs
            refs = _reference(inputs, mask, params, False)
            if not (jnp.allclose(m2_k, refs[4], atol=1e-5, rtol=1e-5)
                    and jnp.allclose(lv2_k, refs[5], atol=1e-5, rtol=1e-5)):
                ok = False
            if not all(bool(jnp.all(jnp.isfinite(o))) for o in outs):
                ok = False
            mz = (1.0 - mask)[..., None]
            if not (bool(jnp.all(y_k * mz == 0.0))
                    and bool(jnp.all(z_k * mz == 0.0))):
                ok = False

    if ok:
        print("KERNEL_OK")
    else:
        print("KERNEL_MISMATCH")
</pallas_src>

<mosaic_0001>
module attributes {stable_mosaic.version = 11 : i64} {
  func.func @_hier_kernel(%arg0: i32, %arg1: memref<8x32xf32, #tpu.memory_space<vmem>>, %arg2: memref<8x1xf32, #tpu.memory_space<vmem>>, %arg3: memref<32x64xf32, #tpu.memory_space<vmem>>, %arg4: memref<1x64xf32, #tpu.memory_space<vmem>>, %arg5: memref<16x32xf32, #tpu.memory_space<vmem>>, %arg6: memref<8x96xf32, #tpu.memory_space<vmem>>) attributes {dimension_semantics = [#tpu.dimension_semantics<parallel>], iteration_bounds = array<i64: 2>, scalar_prefetch = 0 : i64, scratch_operands = 0 : i64, tpu.core_type = #tpu.core_type<tc>, window_params = [{transform_indices = @transform_0, window_bounds = array<i64: 8, 32>}, {transform_indices = @transform_1, window_bounds = array<i64: 8, 1>}, {pipeline_mode = #tpu.pipeline_mode<synchronous>, transform_indices = @transform_2, window_bounds = array<i64: 32, 64>}, {pipeline_mode = #tpu.pipeline_mode<synchronous>, transform_indices = @transform_3, window_bounds = array<i64: 1, 64>}, {pipeline_mode = #tpu.pipeline_mode<synchronous>, transform_indices = @transform_4, window_bounds = array<i64: 16, 32>}, {transform_indices = @transform_5, window_bounds = array<i64: 8, 96>}]} {
    %c0 = arith.constant 0 : index
    %c0_0 = arith.constant 0 : index
    %0 = vector.load %arg1[%c0, %c0_0] : memref<8x32xf32, #tpu.memory_space<vmem>>, vector<8x32xf32>
    %c0_1 = arith.constant 0 : index
    %c0_2 = arith.constant 0 : index
    %1 = vector.load %arg2[%c0_1, %c0_2] : memref<8x1xf32, #tpu.memory_space<vmem>>, vector<8x1xf32>
    %c0_3 = arith.constant 0 : index
    %c0_4 = arith.constant 0 : index
    %2 = vector.load %arg3[%c0_3, %c0_4] : memref<32x64xf32, #tpu.memory_space<vmem>>, vector<32x64xf32>
    %cst = arith.constant dense<0.000000e+00> : vector<8x64xf32>
    %3 = tpu.matmul %0, %2, %cst {dimension_numbers = #tpu.dot_dimension_numbers<[1], [0], [0], [1], [0, 0, 1, 1], [], []>} : vector<8x32xf32>, vector<32x64xf32>, vector<8x64xf32> -> vector<8x64xf32>
    %c0_5 = arith.constant 0 : index
    %c0_6 = arith.constant 0 : index
    %4 = vector.load %arg4[%c0_5, %c0_6] : memref<1x64xf32, #tpu.memory_space<vmem>>, vector<1x64xf32>
    %5 = vector.broadcast %4 : vector<1x64xf32> to vector<8x64xf32>
    %6 = arith.addf %3, %5 : vector<8x64xf32>
    %7 = vector.extract_strided_slice %6 {offsets = [0, 0], sizes = [8, 16], strides = [1, 1]} : vector<8x64xf32> to vector<8x16xf32>
    %8 = vector.broadcast %1 : vector<8x1xf32> to vector<8x16xf32>
    %9 = arith.mulf %7, %8 : vector<8x16xf32>
    %c0_7 = arith.constant 0 : index
    %c0_8 = arith.constant 0 : index
    %10 = vector.load %arg5[%c0_7, %c0_8] : memref<16x32xf32, #tpu.memory_space<vmem>>, vector<16x32xf32>
    %cst_9 = arith.constant dense<0.000000e+00> : vector<8x32xf32>
    %11 = tpu.matmul %9, %10, %cst_9 {dimension_numbers = #tpu.dot_dimension_numbers<[1], [0], [0], [1], [0, 0, 1, 1], [], []>} : vector<8x16xf32>, vector<16x32xf32>, vector<8x32xf32> -> vector<8x32xf32>
    %12 = vector.extract_strided_slice %6 {offsets = [0, 32], sizes = [8, 32], strides = [1, 1]} : vector<8x64xf32> to vector<8x32xf32>
    %13 = arith.addf %12, %11 : vector<8x32xf32>
    %14 = vector.extract_strided_slice %13 {offsets = [0, 0], sizes = [8, 16], strides = [1, 1]} : vector<8x32xf32> to vector<8x16xf32>
    %15 = vector.broadcast %1 : vector<8x1xf32> to vector<8x16xf32>
    %16 = arith.mulf %14, %15 : vector<8x16xf32>
    %17 = vector.extract_strided_slice %6 {offsets = [0, 0], sizes = [8, 32], strides = [1, 1]} : vector<8x64xf32> to vector<8x32xf32>
    %18 = tpu.concatenate %17, %13, %9, %16 in 1 : vector<8x32xf32>, vector<8x32xf32>, vector<8x16xf32>, vector<8x16xf32> -> vector<8x96xf32>
    %c0_10 = arith.constant 0 : index
    %c0_11 = arith.constant 0 : index
    %19 = vector.load %arg6[%c0_10, %c0_11] : memref<8x96xf32, #tpu.memory_space<vmem>>, vector<8x96xf32>
    tpu.vector_store %arg6[%c0_10, %c0_11], %18 {strides = array<i32>} : memref<8x96xf32, #tpu.memory_space<vmem>>, vector<8x96xf32>,
    return
  }
  func.func @transform_0(%arg0: i32) -> (i32, i32) {
    %c0_i32 = arith.constant 0 : i32
    %c0_i32_0 = arith.constant 0 : i32
    return %arg0, %c0_i32 : i32, i32
  }
  func.func @transform_1(%arg0: i32) -> (i32, i32) {
    %c0_i32 = arith.constant 0 : i32
    %c0_i32_0 = arith.constant 0 : i32
    return %arg0, %c0_i32 : i32, i32
  }
  func.func @transform_2(%arg0: i32) -> (i32, i32) {
    %c0_i32 = arith.constant 0 : i32
    %c0_i32_0 = arith.constant 0 : i32
    %c0_i32_1 = arith.constant 0 : i32
    return %c0_i32, %c0_i32_0 : i32, i32
  }
  func.func @transform_3(%arg0: i32) -> (i32, i32) {
    %c0_i32 = arith.constant 0 : i32
    %c0_i32_0 = arith.constant 0 : i32
    %c0_i32_1 = arith.constant 0 : i32
    return %c0_i32, %c0_i32_0 : i32, i32
  }
  func.func @transform_4(%arg0: i32) -> (i32, i32) {
    %c0_i32 = arith.constant 0 : i32
    %c0_i32_0 = arith.constant 0 : i32
    %c0_i32_1 = arith.constant 0 : i32
    return %c0_i32, %c0_i32_0 : i32, i32
  }
  func.func @transform_5(%arg0: i32) -> (i32, i32) {
    %c0_i32 = arith.constant 0 : i32
    %c0_i32_0 = arith.constant 0 : i32
    return %arg0, %c0_i32 : i32, i32
  }
}

</mosaic_0001>

<llo_original>
// kernel: tpu_custom_call.1
$region0: #{tpu_custom_call.1}
  #allocation0 [shape = 'u32[]', space=smem, size = 0x4, offset = 0x4, fixed_abs, tag = 'smem constant byte address 0x4 - core index']
  #allocation1 [shape = 'u32[72,128]{1,0:T(1,128)}', space=vmem, size = 0x9000, scoped, tag = 'internal scratch']
  %s0 = inlined_call_operand.vmem [shape: f32[16,32], index: 0, kind: input, shape index: {}]
  %s1 = inlined_call_operand.vmem [shape: f32[16,1], index: 1, kind: input, shape index: {}]
  %s2 = inlined_call_operand.hbm [shape: f32[32,64], index: 2, kind: input, shape index: {}]
  %s3 = inlined_call_operand.vmem [shape: f32[1,64], index: 3, kind: input, shape index: {}]
  %s4 = inlined_call_operand.hbm [shape: f32[16,32], index: 4, kind: input, shape index: {}]
  %s5 = inlined_call_operand.hbm [shape: f32[16,96], index: 5, kind: output, shape index: {}]
  %s6 = sld [smem:[#allocation0]]
  $region61: #{tpu_custom_call.1} parent=0
    _
  %s8 = ssub.s32 1, %s6
  %s9 = scalar_select 0, %s8, %s6
  $region1: #{tpu_custom_call.1} parent=0
    #allocation2 [shape = 'u8[16384]{0}', space=vmem, size = 0x4000, scoped, tag = 'input window, operand 2, single buffered']
    #allocation3 [shape = 's32[2]{0}', space=sflag, size = 0x8, scoped, tag = 'scoped memory for tpu_custom_call.1']
    #allocation4 [shape = 's32[2]{0}', space=sflag, size = 0x8, scoped, tag = 'scoped memory for tpu_custom_call.1']
    #allocation5 [shape = 'u8[8192]{0}', space=vmem, size = 0x2000, scoped, tag = 'input window, operand 4, single buffered']
    #allocation6 [shape = 's32[1]{0}', space=sflag, size = 0x4, scoped, tag = 'scoped memory for tpu_custom_call.1']
    #allocation7 [shape = 'u8[8192]{0}', space=vmem, size = 0x2000, scoped, tag = 'output window, operand 0']
    %10 = vsyncpa [#allocation3], 0
    %11 = vsyncpa [#allocation6], 0
    %12 = vsyncpa [#allocation4], 0
    %s13 = scalar_lea.sflag [#allocation4], 1
    %14 = vsyncpa %s13, 0
    loop: start=0, step=1, limit=4
    $region2: #{tpu_custom_call.1} parent=1 // loop_pre_header
      _
    $region3: #{tpu_custom_call.1} parent=1 // loop_header
      %s16 = sphi 0, %s20
      %p17 = scmp.ge.s32.totalorder %s16, 4
      %s26 = sphi 0, %s28
      %s29 = sphi 0, %s26
      %s30 = sphi 0, %s29
      %s46 = sphi 0, %s30
      %s52 = sphi 0, %s54
      %s55 = sphi 0, %s52
      %s56 = sphi 0, %s55
      %s72 = sphi 0, %s56
      %s76 = sphi 0, %s76
      %s78 = sphi 0, %s76
      %s79 = sphi 0, %s78
      %s93 = sphi 0, %s79
      %s97 = sphi 0, %s97
      %s99 = sphi 0, %s97
      %s100 = sphi 0, %s99
      %s114 = sphi 0, %s100
      %s118 = sphi 0, %s118
      %s120 = sphi 0, %s118
      %s121 = sphi 0, %s120
      %s135 = sphi 0, %s121
      %s141 = sphi 0, %s143
      %s144 = sphi 0, %s141
      %s145 = sphi 0, %s144
      %s161 = sphi 0, %s145
    $region4: #{tpu_custom_call.1} parent=1 // loop_header_branch
      %19 = sbr.rel (%p17) target = $region8
    $region5: #{tpu_custom_call.1} parent=1 // loop_body
      %s21 = ssub.s32 %s16, 1
      %s22 = ssub.s32 %s16, 2
      %s23 = sadd.s32 %s16, 1
      %s24 = ssub.s32 %s16, %s23
      %p25 = scmp.eq.s32.totalorder %s24, 0
      %s27 = sadd.s32 %s26, 1
      %s28 = scalar_select %p25, %s26, %s27
      %p31 = pneg %p25
      %p32 = scmp.eq.s32.totalorder %s16, 1
      %p33 = por %p31, %p32
      %p34 = scmp.ne.s32.totalorder %s26, %s29
      %p35 = scmp.eq.s32.totalorder %s16, 0
      %p36 = por %p34, %p35
      %p37 = scmp.ne.s32.totalorder %s26, %s29
      %p38 = scmp.eq.s32.totalorder %s21, 1
      %p39 = por %p37, %p38
      %p40 = scmp.ne.s32.totalorder %s29, %s30
      %p41 = scmp.eq.s32.totalorder %s21, 0
      %p42 = por %p40, %p41
      %p43 = scmp.ne.s32.totalorder %s29, %s30
      %p44 = scmp.eq.s32.totalorder %s22, 1
      %p45 = por %p43, %p44
      %p47 = scmp.ne.s32.totalorder %s30, %s46
      %p48 = scmp.eq.s32.totalorder %s22, 0
      %p49 = por %p47, %p48
      %s50 = ssub.s32 %s16, %s23
      %p51 = scmp.eq.s32.totalorder %s50, 0
      %s53 = sadd.s32 %s52, 1
      %s54 = scalar_select %p51, %s52, %s53
      %p57 = pneg %p51
      %p58 = scmp.eq.s32.totalorder %s16, 1
      %p59 = por %p57, %p58
      %p60 = scmp.ne.s32.totalorder %s52, %s55
      %p61 = scmp.eq.s32.totalorder %s16, 0
      %p62 = por %p60, %p61
      %p63 = scmp.ne.s32.totalorder %s52, %s55
      %p64 = scmp.eq.s32.totalorder %s21, 1
      %p65 = por %p63, %p64
      %p66 = scmp.ne.s32.totalorder %s55, %s56
      %p67 = scmp.eq.s32.totalorder %s21, 0
      %p68 = por %p66, %p67
      %p69 = scmp.ne.s32.totalorder %s55, %s56
      %p70 = scmp.eq.s32.totalorder %s22, 1
      %p71 = por %p69, %p70
      %p73 = scmp.ne.s32.totalorder %s56, %s72
      %p74 = scmp.eq.s32.totalorder %s22, 0
      %p75 = por %p73, %p74
      %s77 = sadd.s32 %s76, 1
      %p80 = scmp.eq.s32.totalorder %s16, 1
      %p81 = scmp.ne.s32.totalorder %s76, %s78
      %p82 = scmp.eq.s32.totalorder %s16, 0
      %p83 = por %p81, %p82
      %p84 = scmp.ne.s32.totalorder %s76, %s78
      %p85 = scmp.eq.s32.totalorder %s21, 1
      %p86 = por %p84, %p85
      %p87 = scmp.ne.s32.totalorder %s78, %s79
      %p88 = scmp.eq.s32.totalorder %s21, 0
      %p89 = por %p87, %p88
      %p90 = scmp.ne.s32.totalorder %s78, %s79
      %p91 = scmp.eq.s32.totalorder %s22, 1
      %p92 = por %p90, %p91
      %p94 = scmp.ne.s32.totalorder %s79, %s93
      %p95 = scmp.eq.s32.totalorder %s22, 0
      %p96 = por %p94, %p95
      %s98 = sadd.s32 %s97, 1
      %p101 = scmp.eq.s32.totalorder %s16, 1
      %p102 = scmp.ne.s32.totalorder %s97, %s99
      %p103 = scmp.eq.s32.totalorder %s16, 0
      %p104 = por %p102, %p103
      %p105 = scmp.ne.s32.totalorder %s97, %s99
      %p106 = scmp.eq.s32.totalorder %s21, 1
      %p107 = por %p105, %p106
      %p108 = scmp.ne.s32.totalorder %s99, %s100
      %p109 = scmp.eq.s32.totalorder %s21, 0
      %p110 = por %p108, %p109
      %p111 = scmp.ne.s32.totalorder %s99, %s100
      %p112 = scmp.eq.s32.totalorder %s22, 1
      %p113 = por %p111, %p112
      %p115 = scmp.ne.s32.totalorder %s100, %s114
      %p116 = scmp.eq.s32.totalorder %s22, 0
      %p117 = por %p115, %p116
      %s119 = sadd.s32 %s118, 1
      %p122 = scmp.eq.s32.totalorder %s16, 1
      %p123 = scmp.ne.s32.totalorder %s118, %s120
      %p124 = scmp.eq.s32.totalorder %s16, 0
      %p125 = por %p123, %p124
      %p126 = scmp.ne.s32.totalorder %s118, %s120
      %p127 = scmp.eq.s32.totalorder %s21, 1
      %p128 = por %p126, %p127
      %p129 = scmp.ne.s32.totalorder %s120, %s121
      %p130 = scmp.eq.s32.totalorder %s21, 0
      %p131 = por %p129, %p130
      %p132 = scmp.ne.s32.totalorder %s120, %s121
      %p133 = scmp.eq.s32.totalorder %s22, 1
      %p134 = por %p132, %p133
      %p136 = scmp.ne.s32.totalorder %s121, %s135
      %p137 = scmp.eq.s32.totalorder %s22, 0
      %p138 = por %p136, %p137
      %s139 = ssub.s32 %s16, %s23
      %p140 = scmp.eq.s32.totalorder %s139, 0
      %s142 = sadd.s32 %s141, 1
      %s143 = scalar_select %p140, %s141, %s142
      %p146 = pneg %p140
      %p147 = scmp.eq.s32.totalorder %s16, 1
      %p148 = por %p146, %p147
      %p149 = scmp.ne.s32.totalorder %s141, %s144
      %p150 = scmp.eq.s32.totalorder %s16, 0
      %p151 = por %p149, %p150
      %p152 = scmp.ne.s32.totalorder %s141, %s144
      %p153 = scmp.eq.s32.totalorder %s21, 1
      %p154 = por %p152, %p153
      %p155 = scmp.ne.s32.totalorder %s144, %s145
      %p156 = scmp.eq.s32.totalorder %s21, 0
      %p157 = por %p155, %p156
      %p158 = scmp.ne.s32.totalorder %s144, %s145
      %p159 = scmp.eq.s32.totalorder %s22, 1
      %p160 = por %p158, %p159
      %p162 = scmp.ne.s32.totalorder %s145, %s161
      %p163 = scmp.eq.s32.totalorder %s22, 0
      %p164 = por %p162, %p163
      %p165 = scmp.le.s32.totalorder 1, %s16
      %p166 = scmp.lt.s32.totalorder %s16, 3
      %p167 = pnand %p165, %p166
      %p168 = pneg %p167
      // Predicated region
      $region9: #{tpu_custom_call.1} parent=5 // pred_check
        _
      $region10: #{tpu_custom_call.1} parent=5 // pred_check_branch
        %170 = sbr.rel (%p167) target = $region12
      $region11: #{tpu_custom_call.1} parent=5 // pred_region
        %s171 = ssub.s32 %s16, 1
        // Predicated region
        $region13: #{tpu_custom_call.1} parent=11 // pred_check
          %p172 = pneg %p89
        $region14: #{tpu_custom_call.1} parent=11 // pred_check_branch
          %174 = sbr.rel (%p172) target = $region16
        $region15: #{tpu_custom_call.1} parent=11 // pred_region
          %176 = vsyncadd [#allocation3], 0
          %s177 = sshll.u32 %s2, 4
          %s178 = int_to_ptr.hbm [resolvable:$true] %s177
          %s179 = sshll.u32 [#allocation2], 4
          %s180 = int_to_ptr.vmem [resolvable:$true] %s179
          %185 = dma.hbm_to_vmem [thread:$0]  %s178, 512, %s180, [#allocation3], 128, 128, 8
        $region16: #{tpu_custom_call.1} parent=11 // pred_fallthru
          _
        // Predicated region
        $region17: #{tpu_custom_call.1} parent=11 // pred_check
          %p186 = pneg %p110
        $region18: #{tpu_custom_call.1} parent=11 // pred_check_branch
          %188 = sbr.rel (%p186) target = $region20
        $region19: #{tpu_custom_call.1} parent=11 // pred_region
          _
        $region20: #{tpu_custom_call.1} parent=11 // pred_fallthru
          _
        // Predicated region
        $region21: #{tpu_custom_call.1} parent=11 // pred_check
          %p189 = pneg %p131
        $region22: #{tpu_custom_call.1} parent=11 // pred_check_branch
          %191 = sbr.rel (%p189) target = $region24
        $region23: #{tpu_custom_call.1} parent=11 // pred_region
          %193 = vsyncadd [#allocation6], 0
          %s194 = sshll.u32 %s4, 4
          %s195 = int_to_ptr.hbm [resolvable:$true] %s194
          %s196 = sshll.u32 [#allocation5], 4
          %s197 = int_to_ptr.vmem [resolvable:$true] %s196
          %202 = dma.hbm_to_vmem [thread:$0]  %s195, 256, %s197, [#allocation6], 128, 128, 8
        $region24: #{tpu_custom_call.1} parent=11 // pred_fallthru
          _
      $region12: #{tpu_custom_call.1} parent=5 // pred_fallthru
        _
      %p203 = scmp.lt.s32.totalorder %s16, 2
      // Predicated region
      $region25: #{tpu_custom_call.1} parent=5 // pred_check
        %p204 = pneg %p203
      $region26: #{tpu_custom_call.1} parent=5 // pred_check_branch
        %206 = sbr.rel (%p204) target = $region28
      $region27: #{tpu_custom_call.1} parent=5 // pred_region
        // Predicated region
        $region29: #{tpu_custom_call.1} parent=27 // pred_check
          %p207 = pneg %p36
        $region30: #{tpu_custom_call.1} parent=27 // pred_check_branch
          %209 = sbr.rel (%p207) target = $region32
        $region31: #{tpu_custom_call.1} parent=27 // pred_region
          %p210 = scmp.lt.s32.totalorder %s16, 1
          %s211 = scalar_select %p210, %s16, 1
          %s212 = smul.addr %s211, 8
          %s213 = scalar_lea.vmem %s0, %s212
        $region32: #{tpu_custom_call.1} parent=27 // pred_fallthru
          _
        // Predicated region
        $region33: #{tpu_custom_call.1} parent=27 // pred_check
          %p214 = pneg %p62
        $region34: #{tpu_custom_call.1} parent=27 // pred_check_branch
          %216 = sbr.rel (%p214) target = $region36
        $region35: #{tpu_custom_call.1} parent=27 // pred_region
          %p217 = scmp.lt.s32.totalorder %s16, 1
          %s218 = scalar_select %p217, %s16, 1
          %s219 = smul.addr %s218, 8
          %s220 = scalar_lea.vmem %s1, %s219
        $region36: #{tpu_custom_call.1} parent=27 // pred_fallthru
          _
      $region28: #{tpu_custom_call.1} parent=5 // pred_fallthru
        _
      %p221 = scmp.le.s32.totalorder 1, %s16
      %p222 = scmp.lt.s32.totalorder %s16, 3
      %p223 = pnand %p221, %p222
      %p224 = pneg %p223
      // Predicated region
      $region37: #{tpu_custom_call.1} parent=5 // pred_check
        _
      $region38: #{tpu_custom_call.1} parent=5 // pred_check_branch
        %226 = sbr.rel (%p223) target = $region40
      $region39: #{tpu_custom_call.1} parent=5 // pred_region
        %s227 = ssub.s32 %s16, 1
        // Predicated region
        $region41: #{tpu_custom_call.1} parent=39 // pred_check
          %p228 = pneg %p89
        $region42: #{tpu_custom_call.1} parent=39 // pred_check_branch
          %230 = sbr.rel (%p228) target = $region44
        $region43: #{tpu_custom_call.1} parent=39 // pred_region
          %232 = dma.done [#allocation3], 512
        $region44: #{tpu_custom_call.1} parent=39 // pred_fallthru
          _
        // Predicated region
        $region45: #{tpu_custom_call.1} parent=39 // pred_check
          %p233 = pneg %p131
        $region46: #{tpu_custom_call.1} parent=39 // pred_check_branch
          %235 = sbr.rel (%p233) target = $region48
        $region47: #{tpu_custom_call.1} parent=39 // pred_region
          %237 = dma.done [#allocation6], 256
        $region48: #{tpu_custom_call.1} parent=39 // pred_fallthru
          _
        %p238 = scmp.lt.s32.totalorder %s21, 1
        %s239 = scalar_select %p238, %s21, 1
        %s240 = smul.addr %s239, 8
        %s241 = scalar_lea.vmem %s0, %s240
        %p242 = pneg %p42
        %p243 = pneg %p39
        %p244 = scmp.lt.s32.totalorder %s21, 1
        %s245 = scalar_select %p244, %s21, 1
        %s246 = smul.addr %s245, 8
        %s247 = scalar_lea.vmem %s1, %s246
        %p248 = pneg %p68
        %p249 = pneg %p65
        %p250 = pneg %p89
        %p251 = pneg %p86
        %p252 = pneg %p110
        %p253 = pneg %p107
        %p254 = pneg %p131
        %p255 = pneg %p128
        %p256 = pneg %p157
        %p257 = pneg %p154
        %s258 = sand.u32 %s144, 1
        %s259 = scalar_lea.sflag [#allocation4], %s258
        %s260 = sand.u32 %s144, 1
        %s261 = smul.addr %s260, 8
        %s262 = scalar_lea.vmem [#allocation7], %s261
        %p263 = scmp.lt.s32.totalorder %s21, 1
        %s264 = scalar_select %p263, %s21, 1
        %s265 = smul.addr %s264, 8
        %s266 = scalar_lea.vmem %s0, %s265
        %p267 = scmp.lt.s32.totalorder %s21, 1
        %s268 = scalar_select %p267, %s21, 1
        %s269 = smul.addr %s268, 8
        %s270 = scalar_lea.vmem %s1, %s269
        %v271 = vld [vmem:[%s266] sm:$0xff]
        %v272 = vld [vmem:[%s270] sm:$0xff]
        %v273 = vld [vmem:[#allocation2] sm:$0xff]
        %v274 = vld [vmem:[#allocation2 + $0x8] sm:$0xff]
        %v275 = vld [vmem:[#allocation2 + $0x10] sm:$0xff]
        %v276 = vld [vmem:[#allocation2 + $0x18] sm:$0xff]
        %v277 = vld [vmem:[%s3] sm:$0x1]
        %v279 = vperm.slane %v277, 0
        %vm281 = vcmask 261120
        %v283 = vsel %vm281, %v271, 0
        %285 = vmatpush.msra.mxu0 0.0
        %286 = vmatpush.msra.mxu0 0.0
        %287 = vmatpush.msra.mxu0 0.0
        %288 = vmatpush.msra.mxu0 0.0
        %289 = vmatpush.msra.mxu0 0.0
        %290 = vmatpush.msra.mxu0 0.0
        %291 = vmatpush.msra.mxu0 0.0
        %292 = vmatpush.msra.mxu0 0.0
        %293 = vmatpush.msra.mxu0 0.0
        %294 = vmatpush.msra.mxu0 0.0
        %295 = vmatpush.msra.mxu0 0.0
        %296 = vmatpush.msra.mxu0 0.0
        %297 = vmatpush.msra.mxu0 %v276
        %298 = vmatpush.msra.mxu0 %v275
        %299 = vmatpush.msra.mxu0 %v274
        %300 = vmatpush.msra.mxu0 %v273
        %301 = vmatmul.f32.gmra.mxu0 %v283
        %v302 = vpop.f32.mrf.mxu0
        %v303 = vadd.f32 %v279, %v302
        %304 = vdwg.mxu0
        %306 = vset.pattern.permute.xlu0 0
        %307 = vperm.xlu0 %306, %v272
        %v308 = vpop.permute.xlu0 %307
        %v310 = vmul.f32 %v303, %v308
        %v311 = vld [vmem:[#allocation5] sm:$0xff]
        %v312 = vld [vmem:[#allocation5 + $0x8] sm:$0xff]
        %vm313 = vcmask 130048
        %v315 = vsel %vm313, %v310, 0
        %317 = vmatpush.msra.mxu0 0.0
        %318 = vmatpush.msra.mxu0 0.0
        %319 = vmatpush.msra.mxu0 0.0
        %320 = vmatpush.msra.mxu0 0.0
        %321 = vmatpush.msra.mxu0 0.0
        %322 = vmatpush.msra.mxu0 0.0
        %323 = vmatpush.msra.mxu0 0.0
        %324 = vmatpush.msra.mxu0 0.0
        %325 = vmatpush.msra.mxu0 0.0
        %326 = vmatpush.msra.mxu0 0.0
        %327 = vmatpush.msra.mxu0 0.0
        %328 = vmatpush.msra.mxu0 0.0
        %329 = vmatpush.msra.mxu0 0.0
        %330 = vmatpush.msra.mxu0 0.0
        %331 = vmatpush.msra.mxu0 %v312
        %332 = vmatpush.msra.mxu0 %v311
        %333 = vmatmul.f32.gmra.mxu0 %v315
        %v334 = vpop.f32.mrf.mxu0
        %v335 = vadd.f32 0.0, %v334
        %336 = vdwg.mxu0
        %338 = vrot.lane.b32.xlu0 %v335, 32
        %v339 = vpop.permute.xlu0 %338
        %v341 = vadd.f32 %v303, %v339
        %v342 = vmul.f32 %v341, %v308
        %343 = vrot.lane.b32.xlu0 %v310, 64
        %v344 = vpop.permute.xlu0 %343
        %347 = vrot.lane.b32.xlu0 %v342, 48
        %v348 = vpop.permute.xlu0 %347
        %v350 = vsel %vm281, %v303, %v341
        %vm351 = vcmask 523264
        %v352 = vsel %vm351, %v350, %v344
        %vm353 = vcmask 654336
        %v354 = vsel %vm353, %v352, %v348
        %vm355 = vcmask 785408
        %356 = vst.msk [vmem:[%s262] sm:$0xff] %vm355, %v354
        %s357 = sand.u32 %s144, 1
        %s358 = scalar_lea.sflag [#allocation4], %s357
        %s359 = sand.u32 %s144, 1
        %s360 = smul.addr %s359, 8
        %s361 = scalar_lea.vmem [#allocation7], %s360
        // Predicated region
        $region49: #{tpu_custom_call.1} parent=39 // pred_check
          %p362 = pneg %p154
        $region50: #{tpu_custom_call.1} parent=39 // pred_check_branch
          %364 = sbr.rel (%p362) target = $region52
        $region51: #{tpu_custom_call.1} parent=39 // pred_region
          %366 = vsyncadd %s358, 0
          %s367 = smul.addr %s21, 8
          %s368 = scalar_lea.hbm %s5, %s367
          %s370 = sshll.u32 %s361, 4
          %s371 = int_to_ptr.vmem [resolvable:$true] %s370
          %s372 = sshll.u32 %s368, 4
          %s373 = int_to_ptr.hbm [resolvable:$true] %s372
          %375 = dma.vmem_to_hbm [thread:$0]  %s371, 128, %s373, %s358
        $region52: #{tpu_custom_call.1} parent=39 // pred_fallthru
          _
      $region40: #{tpu_custom_call.1} parent=5 // pred_fallthru
        _
      %p376 = scmp.le.s32.totalorder 2, %s16
      // Predicated region
      $region53: #{tpu_custom_call.1} parent=5 // pred_check
        %p377 = pneg %p376
      $region54: #{tpu_custom_call.1} parent=5 // pred_check_branch
        %379 = sbr.rel (%p377) target = $region56
      $region55: #{tpu_custom_call.1} parent=5 // pred_region
        %s380 = ssub.s32 %s16, 2
        // Predicated region
        $region57: #{tpu_custom_call.1} parent=55 // pred_check
          %p381 = pneg %p160
        $region58: #{tpu_custom_call.1} parent=55 // pred_check_branch
          %383 = sbr.rel (%p381) target = $region60
        $region59: #{tpu_custom_call.1} parent=55 // pred_region
          %s384 = sand.u32 %s145, 1
          %s385 = scalar_lea.sflag [#allocation4], %s384
          %s386 = sand.u32 %s145, 1
          %s387 = smul.addr %s386, 8
          %s388 = scalar_lea.vmem [#allocation7], %s387
          %390 = dma.done %s385, 128
        $region60: #{tpu_custom_call.1} parent=55 // pred_fallthru
          _
      $region56: #{tpu_custom_call.1} parent=5 // pred_fallthru
        _
    $region6: #{tpu_custom_call.1} parent=1 // loop_footer
      %s20 = sadd.s32 1, %s16
    $region7: #{tpu_custom_call.1} parent=1 // loop_footer_branch
      %15 = sbr.rel target = $region3
    $region8: #{tpu_custom_call.1} parent=1 // loop_exit
      _
    %391 = vsyncpa [#allocation3], 1
    %s392 = scalar_lea.sflag [#allocation3], 1
    %393 = vsyncpa %s392, 1
    %394 = vsyncpa [#allocation6], 1
    %395 = vsyncpa [#allocation4], 1
    %s396 = scalar_lea.sflag [#allocation4], 1
    %397 = vsyncpa %s396, 1

</llo_original>
